<compile_context>
chip_gen: v6e
topology: v6e:2x2x1
jax: 0.10.0
libtpu: 0.0.40
codegen_flags: <defaults>
</compile_context>

<pallas_src>
import functools

import jax
import jax.numpy as jnp
from jax.experimental import pallas as pl
from jax.experimental.pallas import tpu as pltpu

_EPS = 1e-5


def _round_up(n, m):
    return (n + m - 1) // m * m


def _bn_fold(v, gamma, beta, n):
    """Training-mode BatchNorm1d on a (C, N) slab folded to scale/offset.

    Returns (scale, offset) with BN(v) == scale * v + offset, using the
    numerically safe two-pass (centered) variance.
    """
    mean = jnp.sum(v, axis=1, keepdims=True) / n
    c = v - mean
    var = jnp.sum(c * c, axis=1, keepdims=True) / n
    inv = jax.lax.rsqrt(var + _EPS)
    scale = gamma * inv
    offset = beta - mean * scale
    return scale, offset


def _fused_conv(h, w_fused, t_idx, L, K, mm_dtype):
    """'same' 1-D conv of a (C, B*L) slab as ONE fused-tap MXU matmul.

    The K taps become lane-shifted copies of `h` (zeros where the shift would
    cross a per-batch boundary), stacked along the contraction axis to
    (K*C, B*L), contracted against w_fused (Cout, K*C) in a single dot.
    """
    C, BL = h.shape
    P = (K - 1) // 2
    if P == 0:
        stacked = h
    else:
        zpad = jnp.zeros((C, P), jnp.float32)
        hp = jnp.concatenate([zpad, h, zpad], axis=1)        # (C, BL + 2P)
        parts = []
        for k in range(K):
            d = k - P                                        # tap offset in [-P, P]
            sl = hp[:, k:k + BL]                             # == h shifted by d
            if d != 0:
                # zero positions whose source index falls outside [0, L)
                # within its own batch segment (handles batch boundaries).
                valid = jnp.logical_and(t_idx + d >= 0, t_idx + d < L)
                sl = jnp.where(valid, sl, 0.0)
            parts.append(sl)
        stacked = jnp.concatenate(parts, axis=0)             # (K*C, BL)
        # NOTE: the shifts could also be pltpu.roll (XLU slot) instead of the
        # padded static slices; slices are kept here for portability.
    return jnp.dot(w_fused.astype(mm_dtype), stacked.astype(mm_dtype),
                   preferred_element_type=jnp.float32)


def _res_se_kernel(*refs, has_proj, K, L, mm_dtype):
    if has_proj:
        (x_ref, t_ref, pool_ref, exp_ref,
         bn0g_ref, bn0b_ref, scw_ref, scb_ref,
         bn1g_ref, bn1b_ref, w1_ref,
         bn2g_ref, bn2b_ref, w2_ref, b2_ref,
         cw_ref, cb_ref, ew_ref, eb_ref, o_ref) = refs
    else:
        (x_ref, t_ref, pool_ref, exp_ref,
         bn1g_ref, bn1b_ref, w1_ref,
         bn2g_ref, bn2b_ref, w2_ref, b2_ref,
         cw_ref, cb_ref, ew_ref, eb_ref, o_ref) = refs

    BL = x_ref.shape[1]
    n = float(BL)                               # BN reduction count = B * L
    t_idx = t_ref[...]                          # (1, BL) int32: position within batch

    x = x_ref[...].astype(jnp.float32)          # (Cin_p, BL) lane-dense slab

    # Shared training-mode BN stats of the input (used by BN0 and BN1).
    mean_in = jnp.sum(x, axis=1, keepdims=True) / n
    xc = x - mean_in
    var_in = jnp.sum(xc * xc, axis=1, keepdims=True) / n
    inv_in = jax.lax.rsqrt(var_in + _EPS)

    # BN1 folded to scale/offset, ReLU.
    s1 = bn1g_ref[...] * inv_in
    o1 = bn1b_ref[...] - mean_in * s1
    h1 = jnp.maximum(s1 * x + o1, 0.0)

    # conv1 (bias intentionally omitted: the training-mode BN2 that follows
    # removes any per-channel constant, so it cannot affect the output).
    y1 = _fused_conv(h1, w1_ref[...], t_idx, L, K, mm_dtype)      # (Cout_p, BL)

    # BN2 + ReLU.
    s2, o2 = _bn_fold(y1, bn2g_ref[...], bn2b_ref[...], n)
    h2 = jnp.maximum(s2 * y1 + o2, 0.0)

    # conv2 (+ bias).
    y2 = _fused_conv(h2, w2_ref[...], t_idx, L, K, mm_dtype) + b2_ref[...]

    # SE: per-batch mean over L via the pooling matrix, two 1x1 convs on the
    # tiny (Cout_p, B) squeeze, gate broadcast back with one small matmul.
    sqz = jnp.dot(y2, pool_ref[...], preferred_element_type=jnp.float32)       # (Cout_p, B)
    z = jnp.maximum(
        jnp.dot(cw_ref[...], sqz, preferred_element_type=jnp.float32) + cb_ref[...],
        0.0)
    g = jax.nn.sigmoid(
        jnp.dot(ew_ref[...], z, preferred_element_type=jnp.float32) + eb_ref[...])
    g_full = jnp.dot(g, exp_ref[...], preferred_element_type=jnp.float32)      # (Cout_p, BL)

    # Shortcut computed last so it is never live across the conv phases.
    if has_proj:
        s0 = bn0g_ref[...] * inv_in
        o0 = bn0b_ref[...] - mean_in * s0
        h0 = jnp.maximum(s0 * x + o0, 0.0)
        sc = jnp.dot(scw_ref[...], h0.astype(mm_dtype),
                     preferred_element_type=jnp.float32) + scb_ref[...]
    else:
        sc = x                                   # identity shortcut (Cin == Cout)

    o_ref[...] = (sc + y2 * g_full).astype(o_ref.dtype)


def res_se_block(x, p, rate=1, mm_dtype=jnp.float32):
    """ResSEBlock forward. x: (B, Cin, L) f32; p: PyTorch-shaped param dict.

    mm_dtype: dtype of MXU matmul operands (jnp.float32 or jnp.bfloat16);
    BN statistics, transcendentals and the final residual add stay f32.
    """
    B, Cin, L = x.shape
    Cout = p['w1'].shape[0]
    K = 2 * rate + 1
    BL = B * L
    has_proj = (Cin != Cout)

    Cin_p = _round_up(Cin, 8)
    Cout_p = _round_up(Cout, 8)

    # (B, Cin, L) -> channel-major lane-dense slab (Cin_p, B*L), zero-padded rows.
    x2d = jnp.transpose(x.astype(jnp.float32), (1, 0, 2)).reshape(Cin, BL)
    x2d = jnp.pad(x2d, ((0, Cin_p - Cin), (0, 0)))

    # Per-column position-within-batch index (conv boundary masking).
    t_idx = jnp.tile(jnp.arange(L, dtype=jnp.int32), B).reshape(1, BL)
    # SE pooling (mean over L per batch) and gate-broadcast matrices.
    expand = jnp.repeat(jnp.eye(B, dtype=jnp.float32), L, axis=1)      # (B, BL)
    pool = expand.T / float(L)                                         # (BL, B)

    def cvec(v, nrows):                       # (C,) -> zero-padded (nrows, 1)
        v = jnp.asarray(v, jnp.float32).reshape(-1, 1)
        return jnp.pad(v, ((0, nrows - v.shape[0]), (0, 0)))

    def mat(w, r, c):                         # (r0, c0[, 1]) -> zero-padded (r, c)
        w = jnp.asarray(w, jnp.float32).reshape(w.shape[0], -1)
        return jnp.pad(w, ((0, r - w.shape[0]), (0, c - w.shape[1])))

    def conv_w(w, ci_p):                      # (Cout, Ci, K) -> fused (Cout_p, K*ci_p)
        w = jnp.asarray(w, jnp.float32)
        w = jnp.pad(w, ((0, Cout_p - w.shape[0]), (0, ci_p - w.shape[1]), (0, 0)))
        return jnp.transpose(w, (0, 2, 1)).reshape(Cout_p, K * ci_p).astype(mm_dtype)

    args = [x2d, t_idx, pool, expand]
    if has_proj:
        args += [cvec(p['bn0_g'], Cin_p), cvec(p['bn0_b'], Cin_p),
                 mat(p['sc_w'], Cout_p, Cin_p).astype(mm_dtype),
                 cvec(p['sc_b'], Cout_p)]
    # p['b1'] is intentionally NOT passed: the training-mode BN right after
    # conv1 cancels any per-channel constant (provably no effect on output).
    args += [cvec(p['bn1_g'], Cin_p), cvec(p['bn1_b'], Cin_p),
             conv_w(p['w1'], Cin_p),
             cvec(p['bn2_g'], Cout_p), cvec(p['bn2_b'], Cout_p),
             conv_w(p['w2'], Cout_p), cvec(p['b2'], Cout_p),
             mat(p['se_c_w'], Cout_p, Cout_p), cvec(p['se_c_b'], Cout_p),
             mat(p['se_e_w'], Cout_p, Cout_p), cvec(p['se_e_b'], Cout_p)]

    kernel = functools.partial(_res_se_kernel, has_proj=has_proj, K=K, L=L,
                               mm_dtype=mm_dtype)

    # Explicit scoped-VMEM budget (defaults are 16 MiB v5e / 32 MiB v6e,v7x).
    est = (4 * BL * (2 * Cin_p + (6 + K) * Cout_p + K * max(Cin_p, Cout_p) + 2 * B)
           + 4 * Cout_p * K * (Cin_p + Cout_p) + (1 << 20))
    vmem_limit = int(min(max(4 * est, 16 * (1 << 20)), 60 * (1 << 20)))

    vmem = pl.BlockSpec(memory_space=pltpu.MemorySpace.VMEM)
    out2d = pl.pallas_call(
        kernel,
        out_shape=jax.ShapeDtypeStruct((Cout_p, BL), jnp.float32),
        in_specs=[vmem] * len(args),
        out_specs=vmem,
        compiler_params=pltpu.CompilerParams(vmem_limit_bytes=vmem_limit),
    )(*args)

    # (Cout_p, B*L) -> (B, Cout, L)
    return jnp.transpose(out2d[:Cout].reshape(Cout, B, L), (1, 0, 2))


# ---------------- pure-JAX reference (for correctness check only) -------------
def ref_res_se_block(x, p, rate=1, has_proj=True):
    eps = 1e-5

    def bn_relu(h, g, b):
        m = h.mean(axis=(0, 2), keepdims=True)
        v = ((h - m) ** 2).mean(axis=(0, 2), keepdims=True)
        hn = g[None, :, None] * (h - m) / jnp.sqrt(v + eps) + b[None, :, None]
        return jnp.maximum(hn, 0.0)

    def conv1d(h, w, bias, pad):
        y = jax.lax.conv_general_dilated(h, w, (1,), [(pad, pad)],
                                         dimension_numbers=('NCH', 'OIH', 'NCH'))
        return y + bias[None, :, None]

    P = rate
    if has_proj:
        sc = conv1d(bn_relu(x, p['bn0_g'], p['bn0_b']), p['sc_w'], p['sc_b'], 0)
    else:
        sc = x
    h = conv1d(bn_relu(x, p['bn1_g'], p['bn1_b']), p['w1'], p['b1'], P)
    h = conv1d(bn_relu(h, p['bn2_g'], p['bn2_b']), p['w2'], p['b2'], P)
    sqz = h.mean(axis=2, keepdims=True)
    z = jnp.maximum(conv1d(sqz, p['se_c_w'], p['se_c_b'], 0), 0.0)
    g = jax.nn.sigmoid(conv1d(z, p['se_e_w'], p['se_e_b'], 0))
    return sc + h * g


def _run_case(key, B, Cin, Cout, L, rate):
    K = 2 * rate + 1
    ks = jax.random.split(key, 17)

    def u(k, shape, s=0.3):
        return jax.random.uniform(k, shape, jnp.float32, -s, s)

    params = {
        'bn0_g': 1.0 + 0.1 * jax.random.normal(ks[0], (Cin,), jnp.float32),
        'bn0_b': 0.1 * jax.random.normal(ks[1], (Cin,), jnp.float32),
        'sc_w': u(ks[2], (Cout, Cin, 1)), 'sc_b': u(ks[3], (Cout,)),
        'bn1_g': 1.0 + 0.1 * jax.random.normal(ks[4], (Cin,), jnp.float32),
        'bn1_b': 0.1 * jax.random.normal(ks[5], (Cin,), jnp.float32),
        'w1': u(ks[6], (Cout, Cin, K)), 'b1': u(ks[7], (Cout,)),
        'bn2_g': 1.0 + 0.1 * jax.random.normal(ks[8], (Cout,), jnp.float32),
        'bn2_b': 0.1 * jax.random.normal(ks[9], (Cout,), jnp.float32),
        'w2': u(ks[10], (Cout, Cout, K)), 'b2': u(ks[11], (Cout,)),
        'se_c_w': u(ks[12], (Cout, Cout, 1)), 'se_c_b': u(ks[13], (Cout,)),
        'se_e_w': u(ks[14], (Cout, Cout, 1)), 'se_e_b': u(ks[15], (Cout,)),
    }
    x = jax.random.normal(ks[16], (B, Cin, L), jnp.float32)
    ref = ref_res_se_block(x, params, rate=rate, has_proj=(Cin != Cout))

    # f32 matmul path (exact-ish).
    out = jax.block_until_ready(res_se_block(x, params, rate=rate))
    assert out.shape == (B, Cout, L), out.shape
    if not jnp.allclose(out, ref, atol=1e-4, rtol=1e-4):
        raise AssertionError(
            f"f32 mismatch (Cin={Cin},Cout={Cout}): "
            f"max abs err = {float(jnp.max(jnp.abs(out - ref)))}")

    # bf16 MXU-operand path (v6e/v7x optimization), loose tolerance.
    out_bf = jax.block_until_ready(
        res_se_block(x, params, rate=rate, mm_dtype=jnp.bfloat16))
    if not jnp.allclose(out_bf, ref, atol=1e-1, rtol=1e-1):
        raise AssertionError(
            f"bf16 mismatch (Cin={Cin},Cout={Cout}): "
            f"max abs err = {float(jnp.max(jnp.abs(out_bf - ref)))}")


if __name__ == "__main__":
    key = jax.random.PRNGKey(0)
    k1, k2 = jax.random.split(key)
    _run_case(k1, B=2, Cin=4, Cout=8, L=16, rate=1)   # projection shortcut path
    _run_case(k2, B=2, Cin=8, Cout=8, L=16, rate=1)   # identity shortcut path
    print("KERNEL_OK")
</pallas_src>

<mosaic_0001>
module attributes {stable_mosaic.version = 11 : i64} {
  func.func @_res_se_kernel(%arg0: memref<8x32xf32, #tpu.memory_space<vmem>>, %arg1: memref<1x32xi32, #tpu.memory_space<vmem>>, %arg2: memref<32x2xf32, #tpu.memory_space<vmem>>, %arg3: memref<2x32xf32, #tpu.memory_space<vmem>>, %arg4: memref<8x1xf32, #tpu.memory_space<vmem>>, %arg5: memref<8x1xf32, #tpu.memory_space<vmem>>, %arg6: memref<8x8xf32, #tpu.memory_space<vmem>>, %arg7: memref<8x1xf32, #tpu.memory_space<vmem>>, %arg8: memref<8x1xf32, #tpu.memory_space<vmem>>, %arg9: memref<8x1xf32, #tpu.memory_space<vmem>>, %arg10: memref<8x24xf32, #tpu.memory_space<vmem>>, %arg11: memref<8x1xf32, #tpu.memory_space<vmem>>, %arg12: memref<8x1xf32, #tpu.memory_space<vmem>>, %arg13: memref<8x24xf32, #tpu.memory_space<vmem>>, %arg14: memref<8x1xf32, #tpu.memory_space<vmem>>, %arg15: memref<8x8xf32, #tpu.memory_space<vmem>>, %arg16: memref<8x1xf32, #tpu.memory_space<vmem>>, %arg17: memref<8x8xf32, #tpu.memory_space<vmem>>, %arg18: memref<8x1xf32, #tpu.memory_space<vmem>>, %arg19: memref<8x32xf32, #tpu.memory_space<vmem>>) attributes {dimension_semantics = [], scalar_prefetch = 0 : i64, scratch_operands = 0 : i64, tpu.core_type = #tpu.core_type<tc>} {
    %c0 = arith.constant 0 : index
    %c0_0 = arith.constant 0 : index
    %0 = vector.load %arg1[%c0, %c0_0] : memref<1x32xi32, #tpu.memory_space<vmem>>, vector<1x32xi32>
    %c0_1 = arith.constant 0 : index
    %c0_2 = arith.constant 0 : index
    %1 = vector.load %arg0[%c0_1, %c0_2] : memref<8x32xf32, #tpu.memory_space<vmem>>, vector<8x32xf32>
    %cst = arith.constant dense<0.000000e+00> : vector<8xf32>
    %2 = vector.multi_reduction <add>, %1, %cst [1] : vector<8x32xf32> to vector<8xf32>
    %3 = vector.shape_cast %2 : vector<8xf32> to vector<8x1xf32>
    %cst_3 = arith.constant 3.200000e+01 : f32
    %4 = vector.broadcast %cst_3 : f32 to vector<8x1xf32>
    %5 = arith.divf %3, %4 : vector<8x1xf32>
    %6 = vector.broadcast %5 : vector<8x1xf32> to vector<8x32xf32>
    %7 = arith.subf %1, %6 : vector<8x32xf32>
    %8 = arith.mulf %7, %7 : vector<8x32xf32>
    %cst_4 = arith.constant dense<0.000000e+00> : vector<8xf32>
    %9 = vector.multi_reduction <add>, %8, %cst_4 [1] : vector<8x32xf32> to vector<8xf32>
    %10 = vector.shape_cast %9 : vector<8xf32> to vector<8x1xf32>
    %cst_5 = arith.constant 3.200000e+01 : f32
    %11 = vector.broadcast %cst_5 : f32 to vector<8x1xf32>
    %12 = arith.divf %10, %11 : vector<8x1xf32>
    %cst_6 = arith.constant 9.99999974E-6 : f32
    %13 = vector.broadcast %cst_6 : f32 to vector<8x1xf32>
    %14 = arith.addf %12, %13 : vector<8x1xf32>
    %15 = math.rsqrt %14 : vector<8x1xf32>
    %c0_7 = arith.constant 0 : index
    %c0_8 = arith.constant 0 : index
    %16 = vector.load %arg8[%c0_7, %c0_8] : memref<8x1xf32, #tpu.memory_space<vmem>>, vector<8x1xf32>
    %17 = arith.mulf %16, %15 : vector<8x1xf32>
    %c0_9 = arith.constant 0 : index
    %c0_10 = arith.constant 0 : index
    %18 = vector.load %arg9[%c0_9, %c0_10] : memref<8x1xf32, #tpu.memory_space<vmem>>, vector<8x1xf32>
    %19 = arith.mulf %5, %17 : vector<8x1xf32>
    %20 = arith.subf %18, %19 : vector<8x1xf32>
    %21 = vector.broadcast %17 : vector<8x1xf32> to vector<8x32xf32>
    %22 = arith.mulf %21, %1 : vector<8x32xf32>
    %23 = vector.broadcast %20 : vector<8x1xf32> to vector<8x32xf32>
    %24 = arith.addf %22, %23 : vector<8x32xf32>
    %cst_11 = arith.constant 0.000000e+00 : f32
    %25 = vector.broadcast %cst_11 : f32 to vector<8x32xf32>
    %26 = arith.maximumf %24, %25 : vector<8x32xf32>
    %c0_12 = arith.constant 0 : index
    %c0_13 = arith.constant 0 : index
    %27 = vector.load %arg10[%c0_12, %c0_13] : memref<8x24xf32, #tpu.memory_space<vmem>>, vector<8x24xf32>
    %cst_14 = arith.constant 0.000000e+00 : f32
    %28 = vector.broadcast %cst_14 : f32 to vector<8x1xf32>
    %29 = tpu.concatenate %28, %26, %28 in 1 : vector<8x1xf32>, vector<8x32xf32>, vector<8x1xf32> -> vector<8x34xf32>
    %30 = vector.extract_strided_slice %29 {offsets = [0, 0], sizes = [8, 32], strides = [1, 1]} : vector<8x34xf32> to vector<8x32xf32>
    %c-1_i32 = arith.constant -1 : i32
    %31 = vector.broadcast %c-1_i32 : i32 to vector<1x32xi32>
    %32 = arith.addi %0, %31 : vector<1x32xi32>
    %c0_i32 = arith.constant 0 : i32
    %33 = vector.broadcast %c0_i32 : i32 to vector<1x32xi32>
    %34 = arith.cmpi sge, %32, %33 : vector<1x32xi32>
    %c-1_i32_15 = arith.constant -1 : i32
    %35 = vector.broadcast %c-1_i32_15 : i32 to vector<1x32xi32>
    %36 = arith.addi %0, %35 : vector<1x32xi32>
    %c16_i32 = arith.constant 16 : i32
    %37 = vector.broadcast %c16_i32 : i32 to vector<1x32xi32>
    %38 = arith.cmpi slt, %36, %37 : vector<1x32xi32>
    %39 = arith.andi %34, %38 : vector<1x32xi1>
    %cst_16 = arith.constant 0.000000e+00 : f32
    %40 = vector.shape_cast %39 : vector<1x32xi1> to vector<1x32xi1>
    %41 = vector.broadcast %40 : vector<1x32xi1> to vector<8x32xi1>
    %42 = vector.broadcast %cst_16 : f32 to vector<8x32xf32>
    %43 = arith.select %41, %30, %42 : vector<8x32xi1>, vector<8x32xf32>
    %44 = vector.extract_strided_slice %29 {offsets = [0, 1], sizes = [8, 32], strides = [1, 1]} : vector<8x34xf32> to vector<8x32xf32>
    %45 = vector.extract_strided_slice %29 {offsets = [0, 2], sizes = [8, 32], strides = [1, 1]} : vector<8x34xf32> to vector<8x32xf32>
    %c1_i32 = arith.constant 1 : i32
    %46 = vector.broadcast %c1_i32 : i32 to vector<1x32xi32>
    %47 = arith.addi %0, %46 : vector<1x32xi32>
    %c0_i32_17 = arith.constant 0 : i32
    %48 = vector.broadcast %c0_i32_17 : i32 to vector<1x32xi32>
    %49 = arith.cmpi sge, %47, %48 : vector<1x32xi32>
    %c1_i32_18 = arith.constant 1 : i32
    %50 = vector.broadcast %c1_i32_18 : i32 to vector<1x32xi32>
    %51 = arith.addi %0, %50 : vector<1x32xi32>
    %c16_i32_19 = arith.constant 16 : i32
    %52 = vector.broadcast %c16_i32_19 : i32 to vector<1x32xi32>
    %53 = arith.cmpi slt, %51, %52 : vector<1x32xi32>
    %54 = arith.andi %49, %53 : vector<1x32xi1>
    %cst_20 = arith.constant 0.000000e+00 : f32
    %55 = vector.shape_cast %54 : vector<1x32xi1> to vector<1x32xi1>
    %56 = vector.broadcast %55 : vector<1x32xi1> to vector<8x32xi1>
    %57 = vector.broadcast %cst_20 : f32 to vector<8x32xf32>
    %58 = arith.select %56, %45, %57 : vector<8x32xi1>, vector<8x32xf32>
    %59 = tpu.concatenate %43, %44, %58 in 0 : vector<8x32xf32>, vector<8x32xf32>, vector<8x32xf32> -> vector<24x32xf32>
    %cst_21 = arith.constant dense<0.000000e+00> : vector<8x32xf32>
    %60 = tpu.matmul %27, %59, %cst_21 {dimension_numbers = #tpu.dot_dimension_numbers<[1], [0], [0], [1], [0, 0, 1, 1], [], []>} : vector<8x24xf32>, vector<24x32xf32>, vector<8x32xf32> -> vector<8x32xf32>
    %c0_22 = arith.constant 0 : index
    %c0_23 = arith.constant 0 : index
    %61 = vector.load %arg11[%c0_22, %c0_23] : memref<8x1xf32, #tpu.memory_space<vmem>>, vector<8x1xf32>
    %c0_24 = arith.constant 0 : index
    %c0_25 = arith.constant 0 : index
    %62 = vector.load %arg12[%c0_24, %c0_25] : memref<8x1xf32, #tpu.memory_space<vmem>>, vector<8x1xf32>
    %cst_26 = arith.constant dense<0.000000e+00> : vector<8xf32>
    %63 = vector.multi_reduction <add>, %60, %cst_26 [1] : vector<8x32xf32> to vector<8xf32>
    %64 = vector.shape_cast %63 : vector<8xf32> to vector<8x1xf32>
    %cst_27 = arith.constant 3.200000e+01 : f32
    %65 = vector.broadcast %cst_27 : f32 to vector<8x1xf32>
    %66 = arith.divf %64, %65 : vector<8x1xf32>
    %67 = vector.broadcast %66 : vector<8x1xf32> to vector<8x32xf32>
    %68 = arith.subf %60, %67 : vector<8x32xf32>
    %69 = arith.mulf %68, %68 : vector<8x32xf32>
    %cst_28 = arith.constant dense<0.000000e+00> : vector<8xf32>
    %70 = vector.multi_reduction <add>, %69, %cst_28 [1] : vector<8x32xf32> to vector<8xf32>
    %71 = vector.shape_cast %70 : vector<8xf32> to vector<8x1xf32>
    %cst_29 = arith.constant 3.200000e+01 : f32
    %72 = vector.broadcast %cst_29 : f32 to vector<8x1xf32>
    %73 = arith.divf %71, %72 : vector<8x1xf32>
    %cst_30 = arith.constant 9.99999974E-6 : f32
    %74 = vector.broadcast %cst_30 : f32 to vector<8x1xf32>
    %75 = arith.addf %73, %74 : vector<8x1xf32>
    %76 = math.rsqrt %75 : vector<8x1xf32>
    %77 = arith.mulf %61, %76 : vector<8x1xf32>
    %78 = arith.mulf %66, %77 : vector<8x1xf32>
    %79 = arith.subf %62, %78 : vector<8x1xf32>
    %80 = vector.broadcast %77 : vector<8x1xf32> to vector<8x32xf32>
    %81 = arith.mulf %80, %60 : vector<8x32xf32>
    %82 = vector.broadcast %79 : vector<8x1xf32> to vector<8x32xf32>
    %83 = arith.addf %81, %82 : vector<8x32xf32>
    %cst_31 = arith.constant 0.000000e+00 : f32
    %84 = vector.broadcast %cst_31 : f32 to vector<8x32xf32>
    %85 = arith.maximumf %83, %84 : vector<8x32xf32>
    %c0_32 = arith.constant 0 : index
    %c0_33 = arith.constant 0 : index
    %86 = vector.load %arg13[%c0_32, %c0_33] : memref<8x24xf32, #tpu.memory_space<vmem>>, vector<8x24xf32>
    %cst_34 = arith.constant 0.000000e+00 : f32
    %87 = vector.broadcast %cst_34 : f32 to vector<8x1xf32>
    %88 = tpu.concatenate %87, %85, %87 in 1 : vector<8x1xf32>, vector<8x32xf32>, vector<8x1xf32> -> vector<8x34xf32>
    %89 = vector.extract_strided_slice %88 {offsets = [0, 0], sizes = [8, 32], strides = [1, 1]} : vector<8x34xf32> to vector<8x32xf32>
    %c-1_i32_35 = arith.constant -1 : i32
    %90 = vector.broadcast %c-1_i32_35 : i32 to vector<1x32xi32>
    %91 = arith.addi %0, %90 : vector<1x32xi32>
    %c0_i32_36 = arith.constant 0 : i32
    %92 = vector.broadcast %c0_i32_36 : i32 to vector<1x32xi32>
    %93 = arith.cmpi sge, %91, %92 : vector<1x32xi32>
    %c-1_i32_37 = arith.constant -1 : i32
    %94 = vector.broadcast %c-1_i32_37 : i32 to vector<1x32xi32>
    %95 = arith.addi %0, %94 : vector<1x32xi32>
    %c16_i32_38 = arith.constant 16 : i32
    %96 = vector.broadcast %c16_i32_38 : i32 to vector<1x32xi32>
    %97 = arith.cmpi slt, %95, %96 : vector<1x32xi32>
    %98 = arith.andi %93, %97 : vector<1x32xi1>
    %cst_39 = arith.constant 0.000000e+00 : f32
    %99 = vector.shape_cast %98 : vector<1x32xi1> to vector<1x32xi1>
    %100 = vector.broadcast %99 : vector<1x32xi1> to vector<8x32xi1>
    %101 = vector.broadcast %cst_39 : f32 to vector<8x32xf32>
    %102 = arith.select %100, %89, %101 : vector<8x32xi1>, vector<8x32xf32>
    %103 = vector.extract_strided_slice %88 {offsets = [0, 1], sizes = [8, 32], strides = [1, 1]} : vector<8x34xf32> to vector<8x32xf32>
    %104 = vector.extract_strided_slice %88 {offsets = [0, 2], sizes = [8, 32], strides = [1, 1]} : vector<8x34xf32> to vector<8x32xf32>
    %c1_i32_40 = arith.constant 1 : i32
    %105 = vector.broadcast %c1_i32_40 : i32 to vector<1x32xi32>
    %106 = arith.addi %0, %105 : vector<1x32xi32>
    %c0_i32_41 = arith.constant 0 : i32
    %107 = vector.broadcast %c0_i32_41 : i32 to vector<1x32xi32>
    %108 = arith.cmpi sge, %106, %107 : vector<1x32xi32>
    %c1_i32_42 = arith.constant 1 : i32
    %109 = vector.broadcast %c1_i32_42 : i32 to vector<1x32xi32>
    %110 = arith.addi %0, %109 : vector<1x32xi32>
    %c16_i32_43 = arith.constant 16 : i32
    %111 = vector.broadcast %c16_i32_43 : i32 to vector<1x32xi32>
    %112 = arith.cmpi slt, %110, %111 : vector<1x32xi32>
    %113 = arith.andi %108, %112 : vector<1x32xi1>
    %cst_44 = arith.constant 0.000000e+00 : f32
    %114 = vector.shape_cast %113 : vector<1x32xi1> to vector<1x32xi1>
    %115 = vector.broadcast %114 : vector<1x32xi1> to vector<8x32xi1>
    %116 = vector.broadcast %cst_44 : f32 to vector<8x32xf32>
    %117 = arith.select %115, %104, %116 : vector<8x32xi1>, vector<8x32xf32>
    %118 = tpu.concatenate %102, %103, %117 in 0 : vector<8x32xf32>, vector<8x32xf32>, vector<8x32xf32> -> vector<24x32xf32>
    %cst_45 = arith.constant dense<0.000000e+00> : vector<8x32xf32>
    %119 = tpu.matmul %86, %118, %cst_45 {dimension_numbers = #tpu.dot_dimension_numbers<[1], [0], [0], [1], [0, 0, 1, 1], [], []>} : vector<8x24xf32>, vector<24x32xf32>, vector<8x32xf32> -> vector<8x32xf32>
    %c0_46 = arith.constant 0 : index
    %c0_47 = arith.constant 0 : index
    %120 = vector.load %arg14[%c0_46, %c0_47] : memref<8x1xf32, #tpu.memory_space<vmem>>, vector<8x1xf32>
    %121 = vector.broadcast %120 : vector<8x1xf32> to vector<8x32xf32>
    %122 = arith.addf %119, %121 : vector<8x32xf32>
    %c0_48 = arith.constant 0 : index
    %c0_49 = arith.constant 0 : index
    %123 = vector.load %arg2[%c0_48, %c0_49] : memref<32x2xf32, #tpu.memory_space<vmem>>, vector<32x2xf32>
    %cst_50 = arith.constant dense<0.000000e+00> : vector<8x2xf32>
    %124 = tpu.matmul %122, %123, %cst_50 {dimension_numbers = #tpu.dot_dimension_numbers<[1], [0], [0], [1], [0, 0, 1, 1], [], []>} : vector<8x32xf32>, vector<32x2xf32>, vector<8x2xf32> -> vector<8x2xf32>
    %c0_51 = arith.constant 0 : index
    %c0_52 = arith.constant 0 : index
    %125 = vector.load %arg15[%c0_51, %c0_52] : memref<8x8xf32, #tpu.memory_space<vmem>>, vector<8x8xf32>
    %cst_53 = arith.constant dense<0.000000e+00> : vector<8x2xf32>
    %126 = tpu.matmul %125, %124, %cst_53 {dimension_numbers = #tpu.dot_dimension_numbers<[1], [0], [0], [1], [0, 0, 1, 1], [], []>} : vector<8x8xf32>, vector<8x2xf32>, vector<8x2xf32> -> vector<8x2xf32>
    %c0_54 = arith.constant 0 : index
    %c0_55 = arith.constant 0 : index
    %127 = vector.load %arg16[%c0_54, %c0_55] : memref<8x1xf32, #tpu.memory_space<vmem>>, vector<8x1xf32>
    %128 = vector.broadcast %127 : vector<8x1xf32> to vector<8x2xf32>
    %129 = arith.addf %126, %128 : vector<8x2xf32>
    %cst_56 = arith.constant 0.000000e+00 : f32
    %130 = vector.broadcast %cst_56 : f32 to vector<8x2xf32>
    %131 = arith.maximumf %129, %130 : vector<8x2xf32>
    %c0_57 = arith.constant 0 : index
    %c0_58 = arith.constant 0 : index
    %132 = vector.load %arg17[%c0_57, %c0_58] : memref<8x8xf32, #tpu.memory_space<vmem>>, vector<8x8xf32>
    %cst_59 = arith.constant dense<0.000000e+00> : vector<8x2xf32>
    %133 = tpu.matmul %132, %131, %cst_59 {dimension_numbers = #tpu.dot_dimension_numbers<[1], [0], [0], [1], [0, 0, 1, 1], [], []>} : vector<8x8xf32>, vector<8x2xf32>, vector<8x2xf32> -> vector<8x2xf32>
    %c0_60 = arith.constant 0 : index
    %c0_61 = arith.constant 0 : index
    %134 = vector.load %arg18[%c0_60, %c0_61] : memref<8x1xf32, #tpu.memory_space<vmem>>, vector<8x1xf32>
    %135 = vector.broadcast %134 : vector<8x1xf32> to vector<8x2xf32>
    %136 = arith.addf %133, %135 : vector<8x2xf32>
    %137 = arith.negf %136 : vector<8x2xf32>
    %138 = math.exp %137 : vector<8x2xf32>
    %cst_62 = arith.constant 1.000000e+00 : f32
    %139 = vector.broadcast %cst_62 : f32 to vector<8x2xf32>
    %140 = arith.addf %139, %138 : vector<8x2xf32>
    %141 = arith.divf %139, %140 : vector<8x2xf32>
    %c0_63 = arith.constant 0 : index
    %c0_64 = arith.constant 0 : index
    %142 = vector.load %arg3[%c0_63, %c0_64] : memref<2x32xf32, #tpu.memory_space<vmem>>, vector<2x32xf32>
    %cst_65 = arith.constant dense<0.000000e+00> : vector<8x32xf32>
    %143 = tpu.matmul %141, %142, %cst_65 {dimension_numbers = #tpu.dot_dimension_numbers<[1], [0], [0], [1], [0, 0, 1, 1], [], []>} : vector<8x2xf32>, vector<2x32xf32>, vector<8x32xf32> -> vector<8x32xf32>
    %c0_66 = arith.constant 0 : index
    %c0_67 = arith.constant 0 : index
    %144 = vector.load %arg4[%c0_66, %c0_67] : memref<8x1xf32, #tpu.memory_space<vmem>>, vector<8x1xf32>
    %145 = arith.mulf %144, %15 : vector<8x1xf32>
    %c0_68 = arith.constant 0 : index
    %c0_69 = arith.constant 0 : index
    %146 = vector.load %arg5[%c0_68, %c0_69] : memref<8x1xf32, #tpu.memory_space<vmem>>, vector<8x1xf32>
    %147 = arith.mulf %5, %145 : vector<8x1xf32>
    %148 = arith.subf %146, %147 : vector<8x1xf32>
    %149 = vector.broadcast %145 : vector<8x1xf32> to vector<8x32xf32>
    %150 = arith.mulf %149, %1 : vector<8x32xf32>
    %151 = vector.broadcast %148 : vector<8x1xf32> to vector<8x32xf32>
    %152 = arith.addf %150, %151 : vector<8x32xf32>
    %cst_70 = arith.constant 0.000000e+00 : f32
    %153 = vector.broadcast %cst_70 : f32 to vector<8x32xf32>
    %154 = arith.maximumf %152, %153 : vector<8x32xf32>
    %c0_71 = arith.constant 0 : index
    %c0_72 = arith.constant 0 : index
    %155 = vector.load %arg6[%c0_71, %c0_72] : memref<8x8xf32, #tpu.memory_space<vmem>>, vector<8x8xf32>
    %cst_73 = arith.constant dense<0.000000e+00> : vector<8x32xf32>
    %156 = tpu.matmul %155, %154, %cst_73 {dimension_numbers = #tpu.dot_dimension_numbers<[1], [0], [0], [1], [0, 0, 1, 1], [], []>} : vector<8x8xf32>, vector<8x32xf32>, vector<8x32xf32> -> vector<8x32xf32>
    %c0_74 = arith.constant 0 : index
    %c0_75 = arith.constant 0 : index
    %157 = vector.load %arg7[%c0_74, %c0_75] : memref<8x1xf32, #tpu.memory_space<vmem>>, vector<8x1xf32>
    %158 = vector.broadcast %157 : vector<8x1xf32> to vector<8x32xf32>
    %159 = arith.addf %156, %158 : vector<8x32xf32>
    %160 = arith.mulf %122, %143 : vector<8x32xf32>
    %161 = arith.addf %159, %160 : vector<8x32xf32>
    %c0_76 = arith.constant 0 : index
    %c0_77 = arith.constant 0 : index
    %162 = vector.load %arg19[%c0_76, %c0_77] : memref<8x32xf32, #tpu.memory_space<vmem>>, vector<8x32xf32>
    tpu.vector_store %arg19[%c0_76, %c0_77], %161 {strides = array<i32>} : memref<8x32xf32, #tpu.memory_space<vmem>>, vector<8x32xf32>,
    return
  }
}

</mosaic_0001>

<llo_original>
// kernel: tpu_custom_call.1
$region0: #{tpu_custom_call.1}
  #allocation0 [shape = 'u32[]', space=smem, size = 0x4, offset = 0x4, fixed_abs, tag = 'smem constant byte address 0x4 - core index']
  #allocation1 [shape = 'u32[144,128]{1,0:T(1,128)}', space=vmem, size = 0x12000, scoped, tag = 'internal scratch']
  %s0 = inlined_call_operand.vmem [shape: f32[8,32], index: 0, kind: input, shape index: {}]
  %s1 = inlined_call_operand.vmem [shape: s32[1,32], index: 1, kind: input, shape index: {}]
  %s2 = inlined_call_operand.vmem [shape: f32[32,2], index: 2, kind: input, shape index: {}]
  %s3 = inlined_call_operand.vmem [shape: f32[2,32], index: 3, kind: input, shape index: {}]
  %s4 = inlined_call_operand.vmem [shape: f32[8,1], index: 4, kind: input, shape index: {}]
  %s5 = inlined_call_operand.vmem [shape: f32[8,1], index: 5, kind: input, shape index: {}]
  %s6 = inlined_call_operand.vmem [shape: f32[8,8], index: 6, kind: input, shape index: {}]
  %s7 = inlined_call_operand.vmem [shape: f32[8,1], index: 7, kind: input, shape index: {}]
  %s8 = inlined_call_operand.vmem [shape: f32[8,1], index: 8, kind: input, shape index: {}]
  %s9 = inlined_call_operand.vmem [shape: f32[8,1], index: 9, kind: input, shape index: {}]
  %s10 = inlined_call_operand.vmem [shape: f32[8,24], index: 10, kind: input, shape index: {}]
  %s11 = inlined_call_operand.vmem [shape: f32[8,1], index: 11, kind: input, shape index: {}]
  %s12 = inlined_call_operand.vmem [shape: f32[8,1], index: 12, kind: input, shape index: {}]
  %s13 = inlined_call_operand.vmem [shape: f32[8,24], index: 13, kind: input, shape index: {}]
  %s14 = inlined_call_operand.vmem [shape: f32[8,1], index: 14, kind: input, shape index: {}]
  %s15 = inlined_call_operand.vmem [shape: f32[8,8], index: 15, kind: input, shape index: {}]
  %s16 = inlined_call_operand.vmem [shape: f32[8,1], index: 16, kind: input, shape index: {}]
  %s17 = inlined_call_operand.vmem [shape: f32[8,8], index: 17, kind: input, shape index: {}]
  %s18 = inlined_call_operand.vmem [shape: f32[8,1], index: 18, kind: input, shape index: {}]
  %s19 = inlined_call_operand.hbm [shape: f32[8,32], index: 19, kind: output, shape index: {}]
  %s20 = sld [smem:[#allocation0]]
  $region86: #{tpu_custom_call.1} parent=0
    _
  %s22 = ssub.s32 1, %s20
  %s23 = scalar_select 0, %s22, %s20
  $region1: #{tpu_custom_call.1} parent=0
    #allocation2 [shape = 'u8[4096]{0}', space=vmem, size = 0x1000, scoped, tag = 'output window, operand 0, single buffered']
    #allocation3 [shape = 's32[1]{0}', space=sflag, size = 0x4, scoped, tag = 'scoped memory for tpu_custom_call.1']
    %24 = vsyncpa [#allocation3], 0
    // Predicated region
    $region2: #{tpu_custom_call.1} parent=1 // pred_check
      _
    $region3: #{tpu_custom_call.1} parent=1 // pred_check_branch
      %26 = sbr.rel (0) target = $region5
    $region4: #{tpu_custom_call.1} parent=1 // pred_region
      _
    $region5: #{tpu_custom_call.1} parent=1 // pred_fallthru
      _
    // Predicated region
    $region6: #{tpu_custom_call.1} parent=1 // pred_check
      _
    $region7: #{tpu_custom_call.1} parent=1 // pred_check_branch
      %28 = sbr.rel (0) target = $region9
    $region8: #{tpu_custom_call.1} parent=1 // pred_region
      _
    $region9: #{tpu_custom_call.1} parent=1 // pred_fallthru
      _
    // Predicated region
    $region10: #{tpu_custom_call.1} parent=1 // pred_check
      _
    $region11: #{tpu_custom_call.1} parent=1 // pred_check_branch
      %30 = sbr.rel (0) target = $region13
    $region12: #{tpu_custom_call.1} parent=1 // pred_region
      _
    $region13: #{tpu_custom_call.1} parent=1 // pred_fallthru
      _
    // Predicated region
    $region14: #{tpu_custom_call.1} parent=1 // pred_check
      _
    $region15: #{tpu_custom_call.1} parent=1 // pred_check_branch
      %32 = sbr.rel (0) target = $region17
    $region16: #{tpu_custom_call.1} parent=1 // pred_region
      _
    $region17: #{tpu_custom_call.1} parent=1 // pred_fallthru
      _
    // Predicated region
    $region18: #{tpu_custom_call.1} parent=1 // pred_check
      _
    $region19: #{tpu_custom_call.1} parent=1 // pred_check_branch
      %34 = sbr.rel (0) target = $region21
    $region20: #{tpu_custom_call.1} parent=1 // pred_region
      _
    $region21: #{tpu_custom_call.1} parent=1 // pred_fallthru
      _
    // Predicated region
    $region22: #{tpu_custom_call.1} parent=1 // pred_check
      _
    $region23: #{tpu_custom_call.1} parent=1 // pred_check_branch
      %36 = sbr.rel (0) target = $region25
    $region24: #{tpu_custom_call.1} parent=1 // pred_region
      _
    $region25: #{tpu_custom_call.1} parent=1 // pred_fallthru
      _
    // Predicated region
    $region26: #{tpu_custom_call.1} parent=1 // pred_check
      _
    $region27: #{tpu_custom_call.1} parent=1 // pred_check_branch
      %38 = sbr.rel (0) target = $region29
    $region28: #{tpu_custom_call.1} parent=1 // pred_region
      _
    $region29: #{tpu_custom_call.1} parent=1 // pred_fallthru
      _
    // Predicated region
    $region30: #{tpu_custom_call.1} parent=1 // pred_check
      _
    $region31: #{tpu_custom_call.1} parent=1 // pred_check_branch
      %40 = sbr.rel (0) target = $region33
    $region32: #{tpu_custom_call.1} parent=1 // pred_region
      _
    $region33: #{tpu_custom_call.1} parent=1 // pred_fallthru
      _
    // Predicated region
    $region34: #{tpu_custom_call.1} parent=1 // pred_check
      _
    $region35: #{tpu_custom_call.1} parent=1 // pred_check_branch
      %42 = sbr.rel (0) target = $region37
    $region36: #{tpu_custom_call.1} parent=1 // pred_region
      _
    $region37: #{tpu_custom_call.1} parent=1 // pred_fallthru
      _
    // Predicated region
    $region38: #{tpu_custom_call.1} parent=1 // pred_check
      _
    $region39: #{tpu_custom_call.1} parent=1 // pred_check_branch
      %44 = sbr.rel (0) target = $region41
    $region40: #{tpu_custom_call.1} parent=1 // pred_region
      _
    $region41: #{tpu_custom_call.1} parent=1 // pred_fallthru
      _
    // Predicated region
    $region42: #{tpu_custom_call.1} parent=1 // pred_check
      _
    $region43: #{tpu_custom_call.1} parent=1 // pred_check_branch
      %46 = sbr.rel (0) target = $region45
    $region44: #{tpu_custom_call.1} parent=1 // pred_region
      _
    $region45: #{tpu_custom_call.1} parent=1 // pred_fallthru
      _
    // Predicated region
    $region46: #{tpu_custom_call.1} parent=1 // pred_check
      _
    $region47: #{tpu_custom_call.1} parent=1 // pred_check_branch
      %48 = sbr.rel (0) target = $region49
    $region48: #{tpu_custom_call.1} parent=1 // pred_region
      _
    $region49: #{tpu_custom_call.1} parent=1 // pred_fallthru
      _
    // Predicated region
    $region50: #{tpu_custom_call.1} parent=1 // pred_check
      _
    $region51: #{tpu_custom_call.1} parent=1 // pred_check_branch
      %50 = sbr.rel (0) target = $region53
    $region52: #{tpu_custom_call.1} parent=1 // pred_region
      _
    $region53: #{tpu_custom_call.1} parent=1 // pred_fallthru
      _
    // Predicated region
    $region54: #{tpu_custom_call.1} parent=1 // pred_check
      _
    $region55: #{tpu_custom_call.1} parent=1 // pred_check_branch
      %52 = sbr.rel (0) target = $region57
    $region56: #{tpu_custom_call.1} parent=1 // pred_region
      _
    $region57: #{tpu_custom_call.1} parent=1 // pred_fallthru
      _
    // Predicated region
    $region58: #{tpu_custom_call.1} parent=1 // pred_check
      _
    $region59: #{tpu_custom_call.1} parent=1 // pred_check_branch
      %54 = sbr.rel (0) target = $region61
    $region60: #{tpu_custom_call.1} parent=1 // pred_region
      _
    $region61: #{tpu_custom_call.1} parent=1 // pred_fallthru
      _
    // Predicated region
    $region62: #{tpu_custom_call.1} parent=1 // pred_check
      _
    $region63: #{tpu_custom_call.1} parent=1 // pred_check_branch
      %56 = sbr.rel (0) target = $region65
    $region64: #{tpu_custom_call.1} parent=1 // pred_region
      _
    $region65: #{tpu_custom_call.1} parent=1 // pred_fallthru
      _
    // Predicated region
    $region66: #{tpu_custom_call.1} parent=1 // pred_check
      _
    $region67: #{tpu_custom_call.1} parent=1 // pred_check_branch
      %58 = sbr.rel (0) target = $region69
    $region68: #{tpu_custom_call.1} parent=1 // pred_region
      _
    $region69: #{tpu_custom_call.1} parent=1 // pred_fallthru
      _
    // Predicated region
    $region70: #{tpu_custom_call.1} parent=1 // pred_check
      _
    $region71: #{tpu_custom_call.1} parent=1 // pred_check_branch
      %60 = sbr.rel (0) target = $region73
    $region72: #{tpu_custom_call.1} parent=1 // pred_region
      _
    $region73: #{tpu_custom_call.1} parent=1 // pred_fallthru
      _
    // Predicated region
    $region74: #{tpu_custom_call.1} parent=1 // pred_check
      _
    $region75: #{tpu_custom_call.1} parent=1 // pred_check_branch
      %62 = sbr.rel (0) target = $region77
    $region76: #{tpu_custom_call.1} parent=1 // pred_region
      _
    $region77: #{tpu_custom_call.1} parent=1 // pred_fallthru
      _
    %v63 = vld [vmem:[%s1] sm:$0x1]
    %v64 = vld [vmem:[%s0] sm:$0xff]
    %vm65 = vcmask 261120
    %v66 = vsel %vm65, %v64, 0.0
    %67 = vadd.xlane.f32.xlu0 %v66
    %v68 = vpop.xlane.xlu0 %67
    %v69 = vrcp.pop 32.0
    %v70 = vmul.f32 %v68, %v69
    %v71 = vsub.f32 %v64, %v70
    %v72 = vmul.f32 %v71, %v71
    %v73 = vsel %vm65, %v72, 0.0
    %74 = vadd.xlane.f32.xlu0 %v73
    %v75 = vpop.xlane.xlu0 %74
    %v76 = vmul.f32 %v75, %v69
    %v77 = vadd.f32 %v76, 1e-05
    %v78 = vrsqrt.pop %v77
    %v79 = vld [vmem:[%s8] sm:$0xff]
    %v80 = vmul.f32 %v79, %v78
    %v81 = vld [vmem:[%s9] sm:$0xff]
    %v82 = vmul.f32 %v70, %v80
    %v83 = vsub.f32 %v81, %v82
    %85 = vset.pattern.permute.xlu0 0
    %86 = vperm.xlu0 %85, %v80
    %v87 = vpop.permute.xlu0 %86
    %v89 = vmul.f32 %v87, %v64
    %91 = vset.pattern.permute.xlu0 0
    %92 = vperm.xlu0 %91, %v83
    %v93 = vpop.permute.xlu0 %92
    %v95 = vadd.f32 %v89, %v93
    %v96 = vmax.f32 %v95, 0.0
    %v97 = vld [vmem:[%s10] sm:$0xff]
    %99 = vrot.lane.b32.xlu0 %v96, 1
    %v100 = vpop.permute.xlu0 %99
    %vm102 = vcmask 7168
    %v103 = vsel %vm102, 0.0, %v100
    %vm104 = vcmask 269312
    %v105 = vsel %vm104, %v103, 0.0
    %v106 = vadd.s32 %v63, 4294967295
    %vm107 = vcmp.ge.s32.totalorder %v106, 0
    %vm108 = vcmp.lt.s32.totalorder %v106, 16
    %vm109 = vmand %vm107, %vm108
    %v110 = vsel %vm109, 1, 0
    %v111 = vlaneseq
    %v112 = vshrl.u32 %v111, 7
    %v113 = vsub.s32 0, %v112
    %v114 = vrot.slane %v110, %v113
    %vm115 = vcmp.eq.s32.totalorder %v114, 1
    %v116 = vsel %vm115, %v105, 0.0
    %v117 = vadd.s32 %v63, 1
    %vm118 = vcmp.ge.s32.totalorder %v117, 0
    %vm119 = vcmp.lt.s32.totalorder %v117, 16
    %vm120 = vmand %vm118, %vm119
    %v121 = vsel %vm120, 1, 0
    %v122 = vlaneseq
    %v123 = vshrl.u32 %v122, 7
    %v124 = vsub.s32 0, %v123
    %v125 = vrot.slane %v121, %v124
    %vm126 = vcmp.eq.s32.totalorder %v125, 1
    %128 = vrot.lane.b32.xlu0 %v105, 126
    %v129 = vpop.permute.xlu0 %128
    %v131 = vsel %vm126, %v129, 0.0
    %132 = vrot.lane.b32.xlu0 %v105, 127
    %v133 = vpop.permute.xlu0 %132
    %vm135 = vcmask 195584
    %v137 = vsel %vm135, %v97, 0
    %139 = vmatprep.subr.mxu0 0.0
    %140 = vmatpush1.msra.mxu0 0.0
    %141 = vmatprep.subr.mxu0 0.0
    %142 = vmatpush1.msra.mxu0 0.0
    %143 = vmatprep.subr.mxu0 0.0
    %144 = vmatpush1.msra.mxu0 0.0
    %145 = vmatprep.subr.mxu0 0.0
    %146 = vmatpush1.msra.mxu0 0.0
    %147 = vmatprep.subr.mxu0 0.0
    %148 = vmatpush1.msra.mxu0 0.0
    %149 = vmatprep.subr.mxu0 0.0
    %150 = vmatpush1.msra.mxu0 0.0
    %151 = vmatprep.subr.mxu0 0.0
    %152 = vmatpush1.msra.mxu0 0.0
    %153 = vmatprep.subr.mxu0 0.0
    %154 = vmatpush1.msra.mxu0 0.0
    %155 = vmatprep.subr.mxu0 0.0
    %156 = vmatpush1.msra.mxu0 0.0
    %157 = vmatprep.subr.mxu0 0.0
    %158 = vmatpush1.msra.mxu0 0.0
    %159 = vmatprep.subr.mxu0 0.0
    %160 = vmatpush1.msra.mxu0 0.0
    %161 = vmatprep.subr.mxu0 0.0
    %162 = vmatpush1.msra.mxu0 0.0
    %163 = vmatprep.subr.mxu0 0.0
    %164 = vmatpush1.msra.mxu0 0.0
    %165 = vmatprep.subr.mxu0 0.0
    %166 = vmatpush1.msra.mxu0 %v131
    %167 = vmatprep.subr.mxu0 0.0
    %168 = vmatpush1.msra.mxu0 %v133
    %169 = vmatprep.subr.mxu0 0.0
    %170 = vmatpush1.msra.mxu0 %v116
    %171 = vmatprep.subr.mxu0 0.0
    %172 = vmatpush2.msra.mxu0 0.0
    %173 = vmatprep.subr.mxu0 0.0
    %174 = vmatpush2.msra.mxu0 0.0
    %175 = vmatprep.subr.mxu0 0.0
    %176 = vmatpush2.msra.mxu0 0.0
    %177 = vmatprep.subr.mxu0 0.0
    %178 = vmatpush2.msra.mxu0 0.0
    %179 = vmatprep.subr.mxu0 0.0
    %180 = vmatpush2.msra.mxu0 0.0
    %181 = vmatprep.subr.mxu0 0.0
    %182 = vmatpush2.msra.mxu0 0.0
    %183 = vmatprep.subr.mxu0 0.0
    %184 = vmatpush2.msra.mxu0 0.0
    %185 = vmatprep.subr.mxu0 0.0
    %186 = vmatpush2.msra.mxu0 0.0
    %187 = vmatprep.subr.mxu0 0.0
    %188 = vmatpush2.msra.mxu0 0.0
    %189 = vmatprep.subr.mxu0 0.0
    %190 = vmatpush2.msra.mxu0 0.0
    %191 = vmatprep.subr.mxu0 0.0
    %192 = vmatpush2.msra.mxu0 0.0
    %193 = vmatprep.subr.mxu0 0.0
    %194 = vmatpush2.msra.mxu0 0.0
    %195 = vmatprep.subr.mxu0 0.0
    %196 = vmatpush2.msra.mxu0 0.0
    %197 = vmatprep.subr.mxu0 0.0
    %198 = vmatpush2.msra.mxu0 0.0
    %199 = vmatprep.subr.mxu0 0.0
    %200 = vmatpush2.msra.mxu0 0.0
    %201 = vmatprep.subr.mxu0 0.0
    %202 = vmatpush2.msra.mxu0 0.0
    %203 = vmatprep.mubr.f32.mxu0 0.0
    %204 = vmatmul.mubr.f32.gmra.mxu0 %v137
    %v205 = vpop.f32.mrf.mxu0
    %v206 = vadd.f32 0.0, %v205
    %v207 = vpop.f32.mrf.mxu0
    %208 = vdwg.mxu0
    %v209 = vld [vmem:[%s11] sm:$0xff]
    %v210 = vld [vmem:[%s12] sm:$0xff]
    %v211 = vsel %vm65, %v206, 0.0
    %212 = vadd.xlane.f32.xlu0 %v211
    %v213 = vpop.xlane.xlu0 %212
    %v214 = vmul.f32 %v213, %v69
    %v215 = vsub.f32 %v206, %v214
    %v216 = vmul.f32 %v215, %v215
    %v217 = vsel %vm65, %v216, 0.0
    %218 = vadd.xlane.f32.xlu0 %v217
    %v219 = vpop.xlane.xlu0 %218
    %v220 = vmul.f32 %v219, %v69
    %v221 = vadd.f32 %v220, 1e-05
    %v222 = vrsqrt.pop %v221
    %v223 = vmul.f32 %v209, %v222
    %v224 = vmul.f32 %v214, %v223
    %v225 = vsub.f32 %v210, %v224
    %227 = vset.pattern.permute.xlu0 0
    %228 = vperm.xlu0 %227, %v223
    %v229 = vpop.permute.xlu0 %228
    %v231 = vmul.f32 %v229, %v206
    %233 = vset.pattern.permute.xlu0 0
    %234 = vperm.xlu0 %233, %v225
    %v235 = vpop.permute.xlu0 %234
    %v237 = vadd.f32 %v231, %v235
    %v238 = vmax.f32 %v237, 0.0
    %v239 = vld [vmem:[%s13] sm:$0xff]
    %241 = vrot.lane.b32.xlu0 %v238, 1
    %v242 = vpop.permute.xlu0 %241
    %v244 = vsel %vm102, 0.0, %v242
    %v245 = vsel %vm104, %v244, 0.0
    %v246 = vsel %vm115, %v245, 0.0
    %248 = vrot.lane.b32.xlu0 %v245, 126
    %v249 = vpop.permute.xlu0 %248
    %v251 = vsel %vm126, %v249, 0.0
    %252 = vrot.lane.b32.xlu0 %v245, 127
    %v253 = vpop.permute.xlu0 %252
    %v255 = vld [vmem:[%s14] sm:$0xff]
    %257 = vset.pattern.permute.xlu0 0
    %258 = vperm.xlu0 %257, %v255
    %v259 = vpop.permute.xlu0 %258
    %v262 = vsel %vm135, %v239, 0
    %264 = vmatprep.subr.mxu0 0.0
    %265 = vmatpush1.msra.mxu0 0.0
    %266 = vmatprep.subr.mxu0 0.0
    %267 = vmatpush1.msra.mxu0 0.0
    %268 = vmatprep.subr.mxu0 0.0
    %269 = vmatpush1.msra.mxu0 0.0
    %270 = vmatprep.subr.mxu0 0.0
    %271 = vmatpush1.msra.mxu0 0.0
    %272 = vmatprep.subr.mxu0 0.0
    %273 = vmatpush1.msra.mxu0 0.0
    %274 = vmatprep.subr.mxu0 0.0
    %275 = vmatpush1.msra.mxu0 0.0
    %276 = vmatprep.subr.mxu0 0.0
    %277 = vmatpush1.msra.mxu0 0.0
    %278 = vmatprep.subr.mxu0 0.0
    %279 = vmatpush1.msra.mxu0 0.0
    %280 = vmatprep.subr.mxu0 0.0
    %281 = vmatpush1.msra.mxu0 0.0
    %282 = vmatprep.subr.mxu0 0.0
    %283 = vmatpush1.msra.mxu0 0.0
    %284 = vmatprep.subr.mxu0 0.0
    %285 = vmatpush1.msra.mxu0 0.0
    %286 = vmatprep.subr.mxu0 0.0
    %287 = vmatpush1.msra.mxu0 0.0
    %288 = vmatprep.subr.mxu0 0.0
    %289 = vmatpush1.msra.mxu0 0.0
    %290 = vmatprep.subr.mxu0 0.0
    %291 = vmatpush1.msra.mxu0 %v251
    %292 = vmatprep.subr.mxu0 0.0
    %293 = vmatpush1.msra.mxu0 %v253
    %294 = vmatprep.subr.mxu0 0.0
    %295 = vmatpush1.msra.mxu0 %v246
    %296 = vmatprep.subr.mxu0 0.0
    %297 = vmatpush2.msra.mxu0 0.0
    %298 = vmatprep.subr.mxu0 0.0
    %299 = vmatpush2.msra.mxu0 0.0
    %300 = vmatprep.subr.mxu0 0.0
    %301 = vmatpush2.msra.mxu0 0.0
    %302 = vmatprep.subr.mxu0 0.0
    %303 = vmatpush2.msra.mxu0 0.0
    %304 = vmatprep.subr.mxu0 0.0
    %305 = vmatpush2.msra.mxu0 0.0
    %306 = vmatprep.subr.mxu0 0.0
    %307 = vmatpush2.msra.mxu0 0.0
    %308 = vmatprep.subr.mxu0 0.0
    %309 = vmatpush2.msra.mxu0 0.0
    %310 = vmatprep.subr.mxu0 0.0
    %311 = vmatpush2.msra.mxu0 0.0
    %312 = vmatprep.subr.mxu0 0.0
    %313 = vmatpush2.msra.mxu0 0.0
    %314 = vmatprep.subr.mxu0 0.0
    %315 = vmatpush2.msra.mxu0 0.0
    %316 = vmatprep.subr.mxu0 0.0
    %317 = vmatpush2.msra.mxu0 0.0
    %318 = vmatprep.subr.mxu0 0.0
    %319 = vmatpush2.msra.mxu0 0.0
    %320 = vmatprep.subr.mxu0 0.0
    %321 = vmatpush2.msra.mxu0 0.0
    %322 = vmatprep.subr.mxu0 0.0
    %323 = vmatpush2.msra.mxu0 0.0
    %324 = vmatprep.subr.mxu0 0.0
    %325 = vmatpush2.msra.mxu0 0.0
    %326 = vmatprep.subr.mxu0 0.0
    %327 = vmatpush2.msra.mxu0 0.0
    %328 = vmatprep.mubr.f32.mxu0 0.0
    %329 = vmatmul.mubr.f32.gmra.mxu0 %v262
    %v330 = vpop.f32.mrf.mxu0
    %v331 = vadd.f32 %v259, %v330
    %v332 = vpop.f32.mrf.mxu0
    %333 = vdwg.mxu0
    %v334 = vld [vmem:[%s2] sm:$0xff]
    %v335 = vld [vmem:[%s2 + $0x8] sm:$0xff]
    %v336 = vld [vmem:[%s2 + $0x10] sm:$0xff]
    %v337 = vld [vmem:[%s2 + $0x18] sm:$0xff]
    %v339 = vsel %vm65, %v331, 0
    %341 = vmatprep.subr.mxu0 0.0
    %342 = vmatpush1.msra.mxu0 0.0
    %343 = vmatprep.subr.mxu0 0.0
    %344 = vmatpush1.msra.mxu0 0.0
    %345 = vmatprep.subr.mxu0 0.0
    %346 = vmatpush1.msra.mxu0 0.0
    %347 = vmatprep.subr.mxu0 0.0
    %348 = vmatpush1.msra.mxu0 0.0
    %349 = vmatprep.subr.mxu0 0.0
    %350 = vmatpush1.msra.mxu0 0.0
    %351 = vmatprep.subr.mxu0 0.0
    %352 = vmatpush1.msra.mxu0 0.0
    %353 = vmatprep.subr.mxu0 0.0
    %354 = vmatpush1.msra.mxu0 0.0
    %355 = vmatprep.subr.mxu0 0.0
    %356 = vmatpush1.msra.mxu0 0.0
    %357 = vmatprep.subr.mxu0 0.0
    %358 = vmatpush1.msra.mxu0 0.0
    %359 = vmatprep.subr.mxu0 0.0
    %360 = vmatpush1.msra.mxu0 0.0
    %361 = vmatprep.subr.mxu0 0.0
    %362 = vmatpush1.msra.mxu0 0.0
    %363 = vmatprep.subr.mxu0 0.0
    %364 = vmatpush1.msra.mxu0 0.0
    %365 = vmatprep.subr.mxu0 0.0
    %366 = vmatpush1.msra.mxu0 %v337
    %367 = vmatprep.subr.mxu0 0.0
    %368 = vmatpush1.msra.mxu0 %v336
    %369 = vmatprep.subr.mxu0 0.0
    %370 = vmatpush1.msra.mxu0 %v335
    %371 = vmatprep.subr.mxu0 0.0
    %372 = vmatpush1.msra.mxu0 %v334
    %373 = vmatprep.subr.mxu0 0.0
    %374 = vmatpush2.msra.mxu0 0.0
    %375 = vmatprep.subr.mxu0 0.0
    %376 = vmatpush2.msra.mxu0 0.0
    %377 = vmatprep.subr.mxu0 0.0
    %378 = vmatpush2.msra.mxu0 0.0
    %379 = vmatprep.subr.mxu0 0.0
    %380 = vmatpush2.msra.mxu0 0.0
    %381 = vmatprep.subr.mxu0 0.0
    %382 = vmatpush2.msra.mxu0 0.0
    %383 = vmatprep.subr.mxu0 0.0
    %384 = vmatpush2.msra.mxu0 0.0
    %385 = vmatprep.subr.mxu0 0.0
    %386 = vmatpush2.msra.mxu0 0.0
    %387 = vmatprep.subr.mxu0 0.0
    %388 = vmatpush2.msra.mxu0 0.0
    %389 = vmatprep.subr.mxu0 0.0
    %390 = vmatpush2.msra.mxu0 0.0
    %391 = vmatprep.subr.mxu0 0.0
    %392 = vmatpush2.msra.mxu0 0.0
    %393 = vmatprep.subr.mxu0 0.0
    %394 = vmatpush2.msra.mxu0 0.0
    %395 = vmatprep.subr.mxu0 0.0
    %396 = vmatpush2.msra.mxu0 0.0
    %397 = vmatprep.subr.mxu0 0.0
    %398 = vmatpush2.msra.mxu0 0.0
    %399 = vmatprep.subr.mxu0 0.0
    %400 = vmatpush2.msra.mxu0 0.0
    %401 = vmatprep.subr.mxu0 0.0
    %402 = vmatpush2.msra.mxu0 0.0
    %403 = vmatprep.subr.mxu0 0.0
    %404 = vmatpush2.msra.mxu0 0.0
    %405 = vmatprep.mubr.f32.mxu0 0.0
    %406 = vmatmul.mubr.f32.gmra.mxu0 %v339
    %v407 = vpop.f32.mrf.mxu0
    %v408 = vadd.f32 0.0, %v407
    %v409 = vpop.f32.mrf.mxu0
    %410 = vdwg.mxu0
    %v411 = vld [vmem:[%s15] sm:$0xff]
    %v412 = vld [vmem:[%s16] sm:$0xff]
    %414 = vset.pattern.permute.xlu0 0
    %415 = vperm.xlu0 %414, %v412
    %v416 = vpop.permute.xlu0 %415
    %vm418 = vcmask 64512
    %v420 = vsel %vm418, %v411, 0
    %422 = vmatprep.subr.mxu0 0.0
    %423 = vmatpush1.msra.mxu0 0.0
    %424 = vmatprep.subr.mxu0 0.0
    %425 = vmatpush1.msra.mxu0 0.0
    %426 = vmatprep.subr.mxu0 0.0
    %427 = vmatpush1.msra.mxu0 0.0
    %428 = vmatprep.subr.mxu0 0.0
    %429 = vmatpush1.msra.mxu0 0.0
    %430 = vmatprep.subr.mxu0 0.0
    %431 = vmatpush1.msra.mxu0 0.0
    %432 = vmatprep.subr.mxu0 0.0
    %433 = vmatpush1.msra.mxu0 0.0
    %434 = vmatprep.subr.mxu0 0.0
    %435 = vmatpush1.msra.mxu0 0.0
    %436 = vmatprep.subr.mxu0 0.0
    %437 = vmatpush1.msra.mxu0 0.0
    %438 = vmatprep.subr.mxu0 0.0
    %439 = vmatpush1.msra.mxu0 0.0
    %440 = vmatprep.subr.mxu0 0.0
    %441 = vmatpush1.msra.mxu0 0.0
    %442 = vmatprep.subr.mxu0 0.0
    %443 = vmatpush1.msra.mxu0 0.0
    %444 = vmatprep.subr.mxu0 0.0
    %445 = vmatpush1.msra.mxu0 0.0
    %446 = vmatprep.subr.mxu0 0.0
    %447 = vmatpush1.msra.mxu0 0.0
    %448 = vmatprep.subr.mxu0 0.0
    %449 = vmatpush1.msra.mxu0 0.0
    %450 = vmatprep.subr.mxu0 0.0
    %451 = vmatpush1.msra.mxu0 0.0
    %452 = vmatprep.subr.mxu0 0.0
    %453 = vmatpush1.msra.mxu0 %v408
    %454 = vmatprep.subr.mxu0 0.0
    %455 = vmatpush2.msra.mxu0 0.0
    %456 = vmatprep.subr.mxu0 0.0
    %457 = vmatpush2.msra.mxu0 0.0
    %458 = vmatprep.subr.mxu0 0.0
    %459 = vmatpush2.msra.mxu0 0.0
    %460 = vmatprep.subr.mxu0 0.0
    %461 = vmatpush2.msra.mxu0 0.0
    %462 = vmatprep.subr.mxu0 0.0
    %463 = vmatpush2.msra.mxu0 0.0
    %464 = vmatprep.subr.mxu0 0.0
    %465 = vmatpush2.msra.mxu0 0.0
    %466 = vmatprep.subr.mxu0 0.0
    %467 = vmatpush2.msra.mxu0 0.0
    %468 = vmatprep.subr.mxu0 0.0
    %469 = vmatpush2.msra.mxu0 0.0
    %470 = vmatprep.subr.mxu0 0.0
    %471 = vmatpush2.msra.mxu0 0.0
    %472 = vmatprep.subr.mxu0 0.0
    %473 = vmatpush2.msra.mxu0 0.0
    %474 = vmatprep.subr.mxu0 0.0
    %475 = vmatpush2.msra.mxu0 0.0
    %476 = vmatprep.subr.mxu0 0.0
    %477 = vmatpush2.msra.mxu0 0.0
    %478 = vmatprep.subr.mxu0 0.0
    %479 = vmatpush2.msra.mxu0 0.0
    %480 = vmatprep.subr.mxu0 0.0
    %481 = vmatpush2.msra.mxu0 0.0
    %482 = vmatprep.subr.mxu0 0.0
    %483 = vmatpush2.msra.mxu0 0.0
    %484 = vmatprep.subr.mxu0 0.0
    %485 = vmatpush2.msra.mxu0 0.0
    %486 = vmatprep.mubr.f32.mxu0 0.0
    %487 = vmatmul.mubr.f32.gmra.mxu0 %v420
    %v488 = vpop.f32.mrf.mxu0
    %v489 = vadd.f32 %v416, %v488
    %v490 = vpop.f32.mrf.mxu0
    %491 = vdwg.mxu0
    %v492 = vmax.f32 %v489, 0.0
    %v493 = vld [vmem:[%s17] sm:$0xff]
    %v494 = vld [vmem:[%s18] sm:$0xff]
    %496 = vset.pattern.permute.xlu0 0
    %497 = vperm.xlu0 %496, %v494
    %v498 = vpop.permute.xlu0 %497
    %v501 = vsel %vm418, %v493, 0
    %503 = vmatprep.subr.mxu0 0.0
    %504 = vmatpush1.msra.mxu0 0.0
    %505 = vmatprep.subr.mxu0 0.0
    %506 = vmatpush1.msra.mxu0 0.0
    %507 = vmatprep.subr.mxu0 0.0
    %508 = vmatpush1.msra.mxu0 0.0
    %509 = vmatprep.subr.mxu0 0.0
    %510 = vmatpush1.msra.mxu0 0.0
    %511 = vmatprep.subr.mxu0 0.0
    %512 = vmatpush1.msra.mxu0 0.0
    %513 = vmatprep.subr.mxu0 0.0
    %514 = vmatpush1.msra.mxu0 0.0
    %515 = vmatprep.subr.mxu0 0.0
    %516 = vmatpush1.msra.mxu0 0.0
    %517 = vmatprep.subr.mxu0 0.0
    %518 = vmatpush1.msra.mxu0 0.0
    %519 = vmatprep.subr.mxu0 0.0
    %520 = vmatpush1.msra.mxu0 0.0
    %521 = vmatprep.subr.mxu0 0.0
    %522 = vmatpush1.msra.mxu0 0.0
    %523 = vmatprep.subr.mxu0 0.0
    %524 = vmatpush1.msra.mxu0 0.0
    %525 = vmatprep.subr.mxu0 0.0
    %526 = vmatpush1.msra.mxu0 0.0
    %527 = vmatprep.subr.mxu0 0.0
    %528 = vmatpush1.msra.mxu0 0.0
    %529 = vmatprep.subr.mxu0 0.0
    %530 = vmatpush1.msra.mxu0 0.0
    %531 = vmatprep.subr.mxu0 0.0
    %532 = vmatpush1.msra.mxu0 0.0
    %533 = vmatprep.subr.mxu0 0.0
    %534 = vmatpush1.msra.mxu0 %v492
    %535 = vmatprep.subr.mxu0 0.0
    %536 = vmatpush2.msra.mxu0 0.0
    %537 = vmatprep.subr.mxu0 0.0
    %538 = vmatpush2.msra.mxu0 0.0
    %539 = vmatprep.subr.mxu0 0.0
    %540 = vmatpush2.msra.mxu0 0.0
    %541 = vmatprep.subr.mxu0 0.0
    %542 = vmatpush2.msra.mxu0 0.0
    %543 = vmatprep.subr.mxu0 0.0
    %544 = vmatpush2.msra.mxu0 0.0
    %545 = vmatprep.subr.mxu0 0.0
    %546 = vmatpush2.msra.mxu0 0.0
    %547 = vmatprep.subr.mxu0 0.0
    %548 = vmatpush2.msra.mxu0 0.0
    %549 = vmatprep.subr.mxu0 0.0
    %550 = vmatpush2.msra.mxu0 0.0
    %551 = vmatprep.subr.mxu0 0.0
    %552 = vmatpush2.msra.mxu0 0.0
    %553 = vmatprep.subr.mxu0 0.0
    %554 = vmatpush2.msra.mxu0 0.0
    %555 = vmatprep.subr.mxu0 0.0
    %556 = vmatpush2.msra.mxu0 0.0
    %557 = vmatprep.subr.mxu0 0.0
    %558 = vmatpush2.msra.mxu0 0.0
    %559 = vmatprep.subr.mxu0 0.0
    %560 = vmatpush2.msra.mxu0 0.0
    %561 = vmatprep.subr.mxu0 0.0
    %562 = vmatpush2.msra.mxu0 0.0
    %563 = vmatprep.subr.mxu0 0.0
    %564 = vmatpush2.msra.mxu0 0.0
    %565 = vmatprep.subr.mxu0 0.0
    %566 = vmatpush2.msra.mxu0 0.0
    %567 = vmatprep.mubr.f32.mxu0 0.0
    %568 = vmatmul.mubr.f32.gmra.mxu0 %v501
    %v569 = vpop.f32.mrf.mxu0
    %v570 = vadd.f32 %v498, %v569
    %v571 = vpop.f32.mrf.mxu0
    %572 = vdwg.mxu0
    %v573 = vxor.u32 %v570, 2147483648
    %v574 = vmul.f32 %v573, 1.442695
    %v575 = vpow.pop %v574
    %v576 = vadd.f32 %v575, 1.0
    %v577 = vrcp.pop %v576
    %v578 = vmul.f32 1.0, %v577
    %v579 = vld [vmem:[%s3] sm:$0x3]
    %vm580 = vcmask 15360
    %v582 = vsel %vm580, %v578, 0
    %vm584 = vcmask 1041408
    %v586 = vsel %vm584, %v579, 0
    %588 = vmatprep.subr.mxu0 0.0
    %589 = vmatpush1.msra.mxu0 0.0
    %590 = vmatprep.subr.mxu0 0.0
    %591 = vmatpush1.msra.mxu0 0.0
    %592 = vmatprep.subr.mxu0 0.0
    %593 = vmatpush1.msra.mxu0 0.0
    %594 = vmatprep.subr.mxu0 0.0
    %595 = vmatpush1.msra.mxu0 0.0
    %596 = vmatprep.subr.mxu0 0.0
    %597 = vmatpush1.msra.mxu0 0.0
    %598 = vmatprep.subr.mxu0 0.0
    %599 = vmatpush1.msra.mxu0 0.0
    %600 = vmatprep.subr.mxu0 0.0
    %601 = vmatpush1.msra.mxu0 0.0
    %602 = vmatprep.subr.mxu0 0.0
    %603 = vmatpush1.msra.mxu0 0.0
    %604 = vmatprep.subr.mxu0 0.0
    %605 = vmatpush1.msra.mxu0 0.0
    %606 = vmatprep.subr.mxu0 0.0
    %607 = vmatpush1.msra.mxu0 0.0
    %608 = vmatprep.subr.mxu0 0.0
    %609 = vmatpush1.msra.mxu0 0.0
    %610 = vmatprep.subr.mxu0 0.0
    %611 = vmatpush1.msra.mxu0 0.0
    %612 = vmatprep.subr.mxu0 0.0
    %613 = vmatpush1.msra.mxu0 0.0
    %614 = vmatprep.subr.mxu0 0.0
    %615 = vmatpush1.msra.mxu0 0.0
    %616 = vmatprep.subr.mxu0 0.0
    %617 = vmatpush1.msra.mxu0 0.0
    %618 = vmatprep.subr.mxu0 0.0
    %619 = vmatpush1.msra.mxu0 %v586
    %620 = vmatprep.subr.mxu0 0.0
    %621 = vmatpush2.msra.mxu0 0.0
    %622 = vmatprep.subr.mxu0 0.0
    %623 = vmatpush2.msra.mxu0 0.0
    %624 = vmatprep.subr.mxu0 0.0
    %625 = vmatpush2.msra.mxu0 0.0
    %626 = vmatprep.subr.mxu0 0.0
    %627 = vmatpush2.msra.mxu0 0.0
    %628 = vmatprep.subr.mxu0 0.0
    %629 = vmatpush2.msra.mxu0 0.0
    %630 = vmatprep.subr.mxu0 0.0
    %631 = vmatpush2.msra.mxu0 0.0
    %632 = vmatprep.subr.mxu0 0.0
    %633 = vmatpush2.msra.mxu0 0.0
    %634 = vmatprep.subr.mxu0 0.0
    %635 = vmatpush2.msra.mxu0 0.0
    %636 = vmatprep.subr.mxu0 0.0
    %637 = vmatpush2.msra.mxu0 0.0
    %638 = vmatprep.subr.mxu0 0.0
    %639 = vmatpush2.msra.mxu0 0.0
    %640 = vmatprep.subr.mxu0 0.0
    %641 = vmatpush2.msra.mxu0 0.0
    %642 = vmatprep.subr.mxu0 0.0
    %643 = vmatpush2.msra.mxu0 0.0
    %644 = vmatprep.subr.mxu0 0.0
    %645 = vmatpush2.msra.mxu0 0.0
    %646 = vmatprep.subr.mxu0 0.0
    %647 = vmatpush2.msra.mxu0 0.0
    %648 = vmatprep.subr.mxu0 0.0
    %649 = vmatpush2.msra.mxu0 0.0
    %650 = vmatprep.subr.mxu0 0.0
    %651 = vmatpush2.msra.mxu0 0.0
    %652 = vmatprep.mubr.f32.mxu0 0.0
    %653 = vmatmul.mubr.f32.gmra.mxu0 %v582
    %v654 = vpop.f32.mrf.mxu0
    %v655 = vadd.f32 0.0, %v654
    %v656 = vpop.f32.mrf.mxu0
    %657 = vdwg.mxu0
    %v658 = vld [vmem:[%s4] sm:$0xff]
    %v659 = vmul.f32 %v658, %v78
    %v660 = vld [vmem:[%s5] sm:$0xff]
    %v661 = vmul.f32 %v70, %v659
    %v662 = vsub.f32 %v660, %v661
    %664 = vset.pattern.permute.xlu0 0
    %665 = vperm.xlu0 %664, %v659
    %v666 = vpop.permute.xlu0 %665
    %v668 = vmul.f32 %v666, %v64
    %670 = vset.pattern.permute.xlu0 0
    %671 = vperm.xlu0 %670, %v662
    %v672 = vpop.permute.xlu0 %671
    %v674 = vadd.f32 %v668, %v672
    %v675 = vmax.f32 %v674, 0.0
    %v676 = vld [vmem:[%s6] sm:$0xff]
    %v677 = vld [vmem:[%s7] sm:$0xff]
    %679 = vset.pattern.permute.xlu0 0
    %680 = vperm.xlu0 %679, %v677
    %v681 = vpop.permute.xlu0 %680
    %v684 = vsel %vm418, %v676, 0
    %686 = vmatprep.subr.mxu0 0.0
    %687 = vmatpush1.msra.mxu0 0.0
    %688 = vmatprep.subr.mxu0 0.0
    %689 = vmatpush1.msra.mxu0 0.0
    %690 = vmatprep.subr.mxu0 0.0
    %691 = vmatpush1.msra.mxu0 0.0
    %692 = vmatprep.subr.mxu0 0.0
    %693 = vmatpush1.msra.mxu0 0.0
    %694 = vmatprep.subr.mxu0 0.0
    %695 = vmatpush1.msra.mxu0 0.0
    %696 = vmatprep.subr.mxu0 0.0
    %697 = vmatpush1.msra.mxu0 0.0
    %698 = vmatprep.subr.mxu0 0.0
    %699 = vmatpush1.msra.mxu0 0.0
    %700 = vmatprep.subr.mxu0 0.0
    %701 = vmatpush1.msra.mxu0 0.0
    %702 = vmatprep.subr.mxu0 0.0
    %703 = vmatpush1.msra.mxu0 0.0
    %704 = vmatprep.subr.mxu0 0.0
    %705 = vmatpush1.msra.mxu0 0.0
    %706 = vmatprep.subr.mxu0 0.0
    %707 = vmatpush1.msra.mxu0 0.0
    %708 = vmatprep.subr.mxu0 0.0
    %709 = vmatpush1.msra.mxu0 0.0
    %710 = vmatprep.subr.mxu0 0.0
    %711 = vmatpush1.msra.mxu0 0.0
    %712 = vmatprep.subr.mxu0 0.0
    %713 = vmatpush1.msra.mxu0 0.0
    %714 = vmatprep.subr.mxu0 0.0
    %715 = vmatpush1.msra.mxu0 0.0
    %716 = vmatprep.subr.mxu0 0.0
    %717 = vmatpush1.msra.mxu0 %v675
    %718 = vmatprep.subr.mxu0 0.0
    %719 = vmatpush2.msra.mxu0 0.0
    %720 = vmatprep.subr.mxu0 0.0
    %721 = vmatpush2.msra.mxu0 0.0
    %722 = vmatprep.subr.mxu0 0.0
    %723 = vmatpush2.msra.mxu0 0.0
    %724 = vmatprep.subr.mxu0 0.0
    %725 = vmatpush2.msra.mxu0 0.0
    %726 = vmatprep.subr.mxu0 0.0
    %727 = vmatpush2.msra.mxu0 0.0
    %728 = vmatprep.subr.mxu0 0.0
    %729 = vmatpush2.msra.mxu0 0.0
    %730 = vmatprep.subr.mxu0 0.0
    %731 = vmatpush2.msra.mxu0 0.0
    %732 = vmatprep.subr.mxu0 0.0
    %733 = vmatpush2.msra.mxu0 0.0
    %734 = vmatprep.subr.mxu0 0.0
    %735 = vmatpush2.msra.mxu0 0.0
    %736 = vmatprep.subr.mxu0 0.0
    %737 = vmatpush2.msra.mxu0 0.0
    %738 = vmatprep.subr.mxu0 0.0
    %739 = vmatpush2.msra.mxu0 0.0
    %740 = vmatprep.subr.mxu0 0.0
    %741 = vmatpush2.msra.mxu0 0.0
    %742 = vmatprep.subr.mxu0 0.0
    %743 = vmatpush2.msra.mxu0 0.0
    %744 = vmatprep.subr.mxu0 0.0
    %745 = vmatpush2.msra.mxu0 0.0
    %746 = vmatprep.subr.mxu0 0.0
    %747 = vmatpush2.msra.mxu0 0.0
    %748 = vmatprep.subr.mxu0 0.0
    %749 = vmatpush2.msra.mxu0 0.0
    %750 = vmatprep.mubr.f32.mxu0 0.0
    %751 = vmatmul.mubr.f32.gmra.mxu0 %v684
    %v752 = vpop.f32.mrf.mxu0
    %v753 = vadd.f32 %v681, %v752
    %v754 = vpop.f32.mrf.mxu0
    %755 = vdwg.mxu0
    %v756 = vmul.f32 %v331, %v655
    %v757 = vadd.f32 %v753, %v756
    %758 = vst.msk [vmem:[#allocation2] sm:$0xff] %vm65, %v757
    // Predicated region
    $region78: #{tpu_custom_call.1} parent=1 // pred_check
      _
    $region79: #{tpu_custom_call.1} parent=1 // pred_check_branch
      %760 = sbr.rel (0) target = $region81
    $region80: #{tpu_custom_call.1} parent=1 // pred_region
      %s762 = ssub.s32 128, 128
      %763 = vsyncadd [#allocation3], %s762
      %s765 = sshll.u32 [#allocation2], 4
      %s766 = int_to_ptr.vmem [resolvable:$true] %s765
      %768 = dma.vmem_to_hbm [thread:$0]  %s766, 128, %s19, [#allocation3]
    $region81: #{tpu_custom_call.1} parent=1 // pred_fallthru
      _
    // Predicated region
    $region82: #{tpu_custom_call.1} parent=1 // pred_check
      _
    $region83: #{tpu_custom_call.1} parent=1 // pred_check_branch
      %770 = sbr.rel (0) target = $region85
    $region84: #{tpu_custom_call.1} parent=1 // pred_region
      %771 = dma.done [#allocation3], 128
    $region85: #{tpu_custom_call.1} parent=1 // pred_fallthru
      _
    %772 = vsyncpa [#allocation3], 1

</llo_original>
